<compile_context>
chip_gen: v7x
topology: tpu7x:2x2x1
jax: 0.10.0
libtpu: 0.0.40
codegen_flags: <defaults>
</compile_context>

<pallas_src>
import jax
import jax.numpy as jnp
from jax.experimental import pallas as pl
from jax.experimental.pallas import tpu as pltpu


def _attention_kernel(x_ref, w_ref, o_ref):
    # x_ref: (Bb, T, H) block of lstm_output
    # w_ref: (1, H)     attention weight (nn.Linear(H, 1, bias=False).weight)
    # o_ref: (Bb, H)    output block
    x = x_ref[...].astype(jnp.float32)                 # (Bb, T, H)
    w = w_ref[...].astype(jnp.float32)                 # (1, H)

    # scores = x @ w^T -> (Bb, T, 1): VPU broadcast-mul + lane reduce (no MXU).
    scores = jnp.sum(x * w[None, :, :], axis=-1, keepdims=True)   # (Bb, T, 1)

    # Numerically stable softmax over the time axis (axis=1), per batch row.
    m = jnp.max(scores, axis=1, keepdims=True)                    # (Bb, 1, 1)
    p = jnp.exp(scores - m)                                       # (Bb, T, 1)
    denom = jnp.sum(p, axis=1, keepdims=True)                     # (Bb, 1, 1)

    # EUP approximate reciprocal + one Newton refinement (full f32 accuracy,
    # essentially free on the tiny (Bb,1,1) tensor).
    inv = pl.reciprocal(denom, approx=True)
    inv = inv * (2.0 - denom * inv)

    # Weighted sum over T as VPU multiply + sublane reduce (no transpose, no
    # MXU matvec); normalization folded into p before the reduce.
    out = jnp.sum((p * inv) * x, axis=1)                          # (Bb, H)
    o_ref[...] = out.astype(o_ref.dtype)


def _choose_block_b(B, T, H, itemsize, vmem_budget_bytes=8 * 1024 * 1024):
    """Largest batch-block whose double-buffered x tile stays within budget."""
    per_row = max(1, T * H * itemsize)
    bb = max(1, vmem_budget_bytes // (2 * per_row))   # 2x: double-buffered input
    if bb >= B:
        return B                                      # whole batch in one block
    bb = max(8, (bb // 8) * 8)                        # sublane-aligned output blocks
    return min(bb, B)


def attention_forward(lstm_output, attn_weight):
    """lstm_output: (B, T, H); attn_weight: (1, H) -> (B, H)."""
    B, T, H = lstm_output.shape
    itemsize = jnp.dtype(lstm_output.dtype).itemsize
    Bb = _choose_block_b(B, T, H, itemsize)
    grid = (pl.cdiv(B, Bb),)

    cost = pl.CostEstimate(
        flops=4 * B * T * H,                     # scores + weighted sum
        transcendentals=B * T,                   # exp
        bytes_accessed=(B * T * H + B * H + H) * itemsize,
    )

    return pl.pallas_call(
        _attention_kernel,
        out_shape=jax.ShapeDtypeStruct((B, H), lstm_output.dtype),
        grid_spec=pltpu.PrefetchScalarGridSpec(
            num_scalar_prefetch=0,
            grid=grid,
            in_specs=[
                pl.BlockSpec((Bb, T, H), lambda b: (b, 0, 0)),
                pl.BlockSpec((1, H), lambda b: (0, 0)),
            ],
            out_specs=pl.BlockSpec((Bb, H), lambda b: (b, 0)),
        ),
        compiler_params=pltpu.CompilerParams(
            dimension_semantics=("parallel",),
        ),
        cost_estimate=cost,
    )(lstm_output, attn_weight)


def attention_ref(lstm_output, attn_weight):
    # Pure-JAX reference matching the PyTorch module exactly.
    scores = jnp.einsum("bth,oh->bto", lstm_output, attn_weight)   # (B, T, 1)
    attn = jax.nn.softmax(scores, axis=1)                          # (B, T, 1)
    out = jnp.einsum("bto,bth->boh", attn, lstm_output)            # (B, 1, H)
    return out[:, 0, :]


if __name__ == "__main__":
    B, T, H = 2, 8, 32  # batch, seq, lstm_hidden_dim

    key = jax.random.PRNGKey(0)
    kx, kw = jax.random.split(key)
    lstm_output = jax.random.normal(kx, (B, T, H), dtype=jnp.float32)
    # nn.Linear(H, 1, bias=False) weight has shape (1, H); deterministic init.
    attn_weight = jax.random.uniform(
        kw, (1, H), dtype=jnp.float32,
        minval=-1.0 / jnp.sqrt(H), maxval=1.0 / jnp.sqrt(H),
    )

    out = attention_forward(lstm_output, attn_weight)
    out = jax.block_until_ready(out)

    ref = attention_ref(lstm_output, attn_weight)
    assert out.shape == (B, H)
    assert jnp.allclose(out, ref, atol=1e-5, rtol=1e-5), "mismatch vs reference"

    print("KERNEL_OK")
</pallas_src>

<mosaic_0001>
module attributes {stable_mosaic.version = 11 : i64} {
  func.func @_attention_kernel(%arg0: i32, %arg1: memref<2x8x32xf32, #tpu.memory_space<vmem>>, %arg2: memref<1x32xf32, #tpu.memory_space<vmem>>, %arg3: memref<2x32xf32, #tpu.memory_space<vmem>>) attributes {dimension_semantics = [#tpu.dimension_semantics<parallel>], iteration_bounds = array<i64: 1>, scalar_prefetch = 0 : i64, scratch_operands = 0 : i64, tpu.core_type = #tpu.core_type<tc>, window_params = [{transform_indices = @transform_0, window_bounds = array<i64: 2, 8, 32>}, {pipeline_mode = #tpu.pipeline_mode<synchronous>, transform_indices = @transform_1, window_bounds = array<i64: 1, 32>}, {transform_indices = @transform_2, window_bounds = array<i64: 2, 32>}]} {
    %c0 = arith.constant 0 : index
    %c0_0 = arith.constant 0 : index
    %c0_1 = arith.constant 0 : index
    %0 = vector.load %arg1[%c0, %c0_0, %c0_1] : memref<2x8x32xf32, #tpu.memory_space<vmem>>, vector<2x8x32xf32>
    %c0_2 = arith.constant 0 : index
    %c0_3 = arith.constant 0 : index
    %1 = vector.load %arg2[%c0_2, %c0_3] : memref<1x32xf32, #tpu.memory_space<vmem>>, vector<1x32xf32>
    %2 = vector.shape_cast %1 : vector<1x32xf32> to vector<1x1x32xf32>
    %3 = vector.broadcast %2 : vector<1x1x32xf32> to vector<2x8x32xf32>
    %4 = arith.mulf %0, %3 : vector<2x8x32xf32>
    %cst = arith.constant dense<0.000000e+00> : vector<2x8xf32>
    %5 = vector.multi_reduction <add>, %4, %cst [2] : vector<2x8x32xf32> to vector<2x8xf32>
    %6 = vector.shape_cast %5 : vector<2x8xf32> to vector<2x8x1xf32>
    %cst_4 = arith.constant dense<0xFF800000> : vector<2x1xf32>
    %7 = vector.multi_reduction <maximumf>, %6, %cst_4 [1] : vector<2x8x1xf32> to vector<2x1xf32>
    %8 = vector.shape_cast %7 : vector<2x1xf32> to vector<2x1x1xf32>
    %9 = vector.broadcast %8 : vector<2x1x1xf32> to vector<2x8x1xf32>
    %10 = arith.subf %6, %9 : vector<2x8x1xf32>
    %11 = math.exp %10 : vector<2x8x1xf32>
    %cst_5 = arith.constant dense<0.000000e+00> : vector<2x1xf32>
    %12 = vector.multi_reduction <add>, %11, %cst_5 [1] : vector<2x8x1xf32> to vector<2x1xf32>
    %13 = vector.shape_cast %12 : vector<2x1xf32> to vector<2x1x1xf32>
    %14 = tpu.reciprocal %13 {approx = true} : vector<2x1x1xf32> -> vector<2x1x1xf32>
    %15 = arith.mulf %13, %14 : vector<2x1x1xf32>
    %cst_6 = arith.constant 2.000000e+00 : f32
    %16 = vector.broadcast %cst_6 : f32 to vector<2x1x1xf32>
    %17 = arith.subf %16, %15 : vector<2x1x1xf32>
    %18 = arith.mulf %14, %17 : vector<2x1x1xf32>
    %19 = vector.broadcast %18 : vector<2x1x1xf32> to vector<2x8x1xf32>
    %20 = arith.mulf %11, %19 : vector<2x8x1xf32>
    %21 = vector.broadcast %20 : vector<2x8x1xf32> to vector<2x8x32xf32>
    %22 = arith.mulf %21, %0 : vector<2x8x32xf32>
    %cst_7 = arith.constant dense<0.000000e+00> : vector<2x32xf32>
    %23 = vector.multi_reduction <add>, %22, %cst_7 [1] : vector<2x8x32xf32> to vector<2x32xf32>
    %c0_8 = arith.constant 0 : index
    %c0_9 = arith.constant 0 : index
    %24 = vector.load %arg3[%c0_8, %c0_9] : memref<2x32xf32, #tpu.memory_space<vmem>>, vector<2x32xf32>
    tpu.vector_store %arg3[%c0_8, %c0_9], %23 {strides = array<i32>} : memref<2x32xf32, #tpu.memory_space<vmem>>, vector<2x32xf32>,
    return
  }
  func.func @transform_0(%arg0: i32) -> (i32, i32, i32) {
    %c0_i32 = arith.constant 0 : i32
    %c0_i32_0 = arith.constant 0 : i32
    %c0_i32_1 = arith.constant 0 : i32
    return %arg0, %c0_i32, %c0_i32_0 : i32, i32, i32
  }
  func.func @transform_1(%arg0: i32) -> (i32, i32) {
    %c0_i32 = arith.constant 0 : i32
    %c0_i32_0 = arith.constant 0 : i32
    %c0_i32_1 = arith.constant 0 : i32
    return %c0_i32, %c0_i32_0 : i32, i32
  }
  func.func @transform_2(%arg0: i32) -> (i32, i32) {
    %c0_i32 = arith.constant 0 : i32
    %c0_i32_0 = arith.constant 0 : i32
    return %arg0, %c0_i32 : i32, i32
  }
}

</mosaic_0001>

<llo_original>
// kernel: tpu_custom_call.1
$region0: #{tpu_custom_call.1}
  #allocation0 [shape = 'u32[]', space=smem, size = 0x4, offset = 0x4, fixed_abs, tag = 'smem constant byte address 0x4 - core index']
  #allocation1 [shape = 'u32[144,128]{1,0:T(1,128)}', space=vmem, size = 0x12000, scoped, tag = 'internal scratch']
  %s0 = inlined_call_operand.hbm [shape: f32[2,8,32], index: 0, kind: input, shape index: {}]
  %s1 = inlined_call_operand.vmem [shape: f32[1,32], index: 1, kind: input, shape index: {}]
  %s2 = inlined_call_operand.hbm [shape: f32[2,32], index: 2, kind: output, shape index: {}]
  %s3 = sld [smem:[#allocation0]]
  $region22: #{tpu_custom_call.1} parent=0
    _
  %s5 = ssub.s32 1, %s3
  %s6 = scalar_select 0, %s5, %s3
  $region1: #{tpu_custom_call.1} parent=0
    #allocation2 [shape = 'u8[8192]{0}', space=vmem, size = 0x2000, scoped, tag = 'input window, operand 0, single buffered']
    #allocation3 [shape = 's32[1]{0}', space=sflag, size = 0x4, scoped, tag = 'scoped memory for tpu_custom_call.1']
    #allocation4 [shape = 's32[1]{0}', space=sflag, size = 0x4, scoped, tag = 'scoped memory for tpu_custom_call.1']
    #allocation5 [shape = 'u8[1024]{0}', space=vmem, size = 0x400, scoped, tag = 'output window, operand 0, single buffered']
    %7 = vsyncpa [#allocation3], 0
    %8 = vsyncpa [#allocation4], 0
    // Predicated region
    $region2: #{tpu_custom_call.1} parent=1 // pred_check
      _
    $region3: #{tpu_custom_call.1} parent=1 // pred_check_branch
      %10 = sbr.rel (0) target = $region5
    $region4: #{tpu_custom_call.1} parent=1 // pred_region
      %s12 = ssub.s32 256, 256
      %13 = vsyncadd [#allocation3], %s12
      %s14 = sshll.u32 [#allocation2], 4
      %s15 = int_to_ptr.vmem [resolvable:$true] %s14
      %20 = dma.hbm_to_vmem [thread:$0]  %s0, 256, %s15, [#allocation3], 128, 128, 8
    $region5: #{tpu_custom_call.1} parent=1 // pred_fallthru
      _
    // Predicated region
    $region6: #{tpu_custom_call.1} parent=1 // pred_check
      _
    $region7: #{tpu_custom_call.1} parent=1 // pred_check_branch
      %22 = sbr.rel (0) target = $region9
    $region8: #{tpu_custom_call.1} parent=1 // pred_region
      _
    $region9: #{tpu_custom_call.1} parent=1 // pred_fallthru
      _
    // Predicated region
    $region10: #{tpu_custom_call.1} parent=1 // pred_check
      _
    $region11: #{tpu_custom_call.1} parent=1 // pred_check_branch
      %24 = sbr.rel (0) target = $region13
    $region12: #{tpu_custom_call.1} parent=1 // pred_region
      %25 = dma.done [#allocation3], 256
    $region13: #{tpu_custom_call.1} parent=1 // pred_fallthru
      _
    %v26 = vld [vmem:[#allocation2] sm:$0xff]
    %v27 = vld [vmem:[#allocation2 + $0x8] sm:$0xff]
    %v28 = vld [vmem:[%s1] sm:$0x1]
    %v30 = vlaneseq
    %v31 = vshrl.u32 %v30, 7
    %v32 = vsub.s32 0, %v31
    %v33 = vrot.slane %v28, %v32
    %v35 = vmul.f32 %v26, %v33
    %v36 = vmul.f32 %v27, %v33
    %vm37 = vcmask 261120
    %v38 = vsel %vm37, %v35, 0.0
    %39 = vadd.xlane.f32.xlu0 %v38
    %v40 = vpop.xlane.xlu0 %39
    %v41 = vsel %vm37, %v36, 0.0
    %42 = vadd.xlane.f32.xlu0 %v41
    %v43 = vpop.xlane.xlu0 %42
    %v44 = vrot.slane %v40, 4
    %v45 = vmax.f32 %v40, %v44
    %v46 = vrot.slane %v45, 2
    %v47 = vmax.f32 %v45, %v46
    %v48 = vrot.slane %v47, 1
    %v49 = vmax.f32 %v47, %v48
    %v50 = vrot.slane %v43, 4
    %v51 = vmax.f32 %v43, %v50
    %v52 = vrot.slane %v51, 2
    %v53 = vmax.f32 %v51, %v52
    %v54 = vrot.slane %v53, 1
    %v55 = vmax.f32 %v53, %v54
    %v56 = vsub.f32 %v40, %v49
    %v57 = vsub.f32 %v43, %v55
    %v58 = vmul.f32 %v56, 1.442695
    %v59 = vpow.pop %v58
    %v60 = vmul.f32 %v57, 1.442695
    %v61 = vpow.pop %v60
    %v62 = vrot.slane %v59, 4
    %v63 = vadd.f32 %v59, %v62
    %v64 = vrot.slane %v63, 2
    %v65 = vadd.f32 %v63, %v64
    %v66 = vrot.slane %v65, 1
    %v67 = vadd.f32 %v65, %v66
    %v68 = vrot.slane %v61, 4
    %v69 = vadd.f32 %v61, %v68
    %v70 = vrot.slane %v69, 2
    %v71 = vadd.f32 %v69, %v70
    %v72 = vrot.slane %v71, 1
    %v73 = vadd.f32 %v71, %v72
    %v74 = vrcp.pop %v67
    %v75 = vrcp.pop %v73
    %v76 = vmul.f32 %v67, %v74
    %v77 = vmul.f32 %v73, %v75
    %v78 = vsub.f32 2.0, %v76
    %v79 = vsub.f32 2.0, %v77
    %v80 = vmul.f32 %v74, %v78
    %v81 = vmul.f32 %v75, %v79
    %v82 = vmul.f32 %v59, %v80
    %v83 = vmul.f32 %v61, %v81
    %v84 = vmul.f32 %v82, %v26
    %v85 = vmul.f32 %v83, %v27
    %v86 = vsel %vm37, %v84, 0.0
    %v87 = vrot.slane %v86, 4
    %v88 = vadd.f32 %v86, %v87
    %v89 = vrot.slane %v88, 2
    %v90 = vadd.f32 %v88, %v89
    %v91 = vrot.slane %v90, 1
    %v92 = vadd.f32 %v90, %v91
    %v93 = vsel %vm37, %v85, 0.0
    %v94 = vrot.slane %v93, 4
    %v95 = vadd.f32 %v93, %v94
    %v96 = vrot.slane %v95, 2
    %v97 = vadd.f32 %v95, %v96
    %v98 = vrot.slane %v97, 1
    %v99 = vadd.f32 %v97, %v98
    %vm102 = vcmask 1041409
    %v103 = vsel %vm102, %v99, %v92
    %vm105 = vcmask 254976
    %106 = vst.msk [vmem:[#allocation5] sm:$0x3] %vm105, %v103
    // Predicated region
    $region14: #{tpu_custom_call.1} parent=1 // pred_check
      _
    $region15: #{tpu_custom_call.1} parent=1 // pred_check_branch
      %108 = sbr.rel (0) target = $region17
    $region16: #{tpu_custom_call.1} parent=1 // pred_region
      %s110 = ssub.s32 32, 32
      %111 = vsyncadd [#allocation4], %s110
      %s113 = sshll.u32 [#allocation5], 4
      %s114 = int_to_ptr.vmem [resolvable:$true] %s113
      %116 = dma.vmem_to_hbm [thread:$0]  %s114, 32, %s2, [#allocation4]
    $region17: #{tpu_custom_call.1} parent=1 // pred_fallthru
      _
    // Predicated region
    $region18: #{tpu_custom_call.1} parent=1 // pred_check
      _
    $region19: #{tpu_custom_call.1} parent=1 // pred_check_branch
      %118 = sbr.rel (0) target = $region21
    $region20: #{tpu_custom_call.1} parent=1 // pred_region
      %119 = dma.done [#allocation4], 32
    $region21: #{tpu_custom_call.1} parent=1 // pred_fallthru
      _
    %120 = vsyncpa [#allocation3], 1
    %121 = vsyncpa [#allocation4], 1

</llo_original>
